<compile_context>
chip_gen: v7x
topology: tpu7x:2x2x1
jax: 0.10.0
libtpu: 0.0.40
codegen_flags: <defaults>
</compile_context>

<pallas_src>
import jax
import jax.numpy as jnp
from jax.experimental import pallas as pl
from jax.experimental.pallas import tpu as pltpu


NEG_SLOPE = 0.2
LANE = 128


def _leaky_relu(x):
    return jnp.where(x > 0, x, NEG_SLOPE * x)


def _round_up(x, m):
    return (x + m - 1) // m * m


def make_mlp_kernel(din):
    """din = network_dim (static, small: drives the VPU FMA unroll)."""

    def kernel(x_ref, w1_ref, b1_ref, wh_ref, bh_ref, wo_ref, bo_ref, o_ref):
        x = x_ref[...]                      # (tm, din)  f32
        w1 = w1_ref[...]                    # (din, H)   f32

        # ---- layer1 on the VPU (K = din is tiny; keep the MXU free) -------
        h = x[:, 0:1] * w1[0:1, :]
        for k in range(1, din):
            h = h + x[:, k:k + 1] * w1[k:k + 1, :]
        h = _leaky_relu(h + b1_ref[...])

        # ---- folded hidden Sequential: one MXU matmul (bf16 in, f32 acc) ---
        h = jnp.dot(h.astype(jnp.bfloat16), wh_ref[...],
                    preferred_element_type=jnp.float32) + bh_ref[...]
        h = _leaky_relu(h)

        # ---- outlayer, lane-padded to 128; bf16 store (lane-dense, cheap) --
        o_ref[...] = (jnp.dot(h.astype(jnp.bfloat16), wo_ref[...],
                              preferred_element_type=jnp.float32)
                      + bo_ref[...]).astype(o_ref.dtype)

    return kernel


def _fold_hidden_chain(params):
    """Fold params[1:-1] (Linear chain with no activation between) into one
    (W, b) pair, in f32. Exact algebra: h@W2+b2 @W3+b3 ... == h@Wf + bf."""
    hidden = params[0][0].shape[1]
    mids = params[1:-1]
    if not mids:
        return (jnp.eye(hidden, dtype=jnp.float32),
                jnp.zeros((1, hidden), jnp.float32))
    wf = mids[0][0].astype(jnp.float32)
    bf = mids[0][1].astype(jnp.float32)
    for (w, b) in mids[1:]:
        w = w.astype(jnp.float32)
        wf = wf @ w
        bf = bf @ w + b.astype(jnp.float32)
    return wf, bf


def _choose_tm(n, tm_max=1024, min_tiles=2):
    """Big tiles amortize the ~0.35us per-grid-step overhead; keep >= min_tiles
    steps so both v7x TensorCores get work on the parallel batch axis. 128-row
    alignment keeps every (tm, 128) output store an unmasked full tile."""
    tm = _round_up(pl.cdiv(n, min_tiles), LANE)
    return int(max(LANE, min(tm_max, tm)))


def mlp_forward(x, params, *, tm=None):
    """x: (N, network_dim) float32.
    params: list of (W, b) with W:(in, out) (= nn.Linear.weight.T), b:(1, out).
    params[0]=layer1, params[1:-1]=hidden Sequential, params[-1]=outlayer."""
    N, din = x.shape
    dout = params[-1][0].shape[1]

    if tm is None:
        tm = _choose_tm(N)
    n_pad = pl.cdiv(N, tm) * tm
    if n_pad != N:
        x = jnp.pad(x, ((0, n_pad - N), (0, 0)))

    # layer1 stays f32 (VPU path in the kernel).
    w1 = params[0][0].astype(jnp.float32)
    b1 = params[0][1].astype(jnp.float32)

    # Fold the activation-free hidden chain in f32; bf16 weight for the MXU.
    wh_f32, bh_f32 = _fold_hidden_chain(params)
    wh = wh_f32.astype(jnp.bfloat16)
    bh = bh_f32.astype(jnp.float32)

    # Lane-dense output: zero-pad outlayer to a 128-lane multiple.
    wo, bo = params[-1]
    dpad = max(LANE, pl.cdiv(dout, LANE) * LANE)
    if dpad != dout:
        wo = jnp.pad(wo, ((0, 0), (0, dpad - dout)))
        bo = jnp.pad(bo, ((0, 0), (0, dpad - dout)))
    wo = wo.astype(jnp.bfloat16)
    bo = bo.astype(jnp.float32)

    def full(shape):
        # Constant-index block: weight/bias stays resident in VMEM.
        return pl.BlockSpec(shape, lambda i: (0, 0))

    out = pl.pallas_call(
        make_mlp_kernel(din),
        out_shape=jax.ShapeDtypeStruct((n_pad, dpad), jnp.bfloat16),
        grid_spec=pltpu.PrefetchScalarGridSpec(
            num_scalar_prefetch=0,
            grid=(n_pad // tm,),
            in_specs=[pl.BlockSpec((tm, din), lambda i: (i, 0)),
                      full(w1.shape), full(b1.shape),
                      full(wh.shape), full(bh.shape),
                      full(wo.shape), full(bo.shape)],
            out_specs=pl.BlockSpec((tm, dpad), lambda i: (i, 0)),
        ),
        compiler_params=pltpu.CompilerParams(
            dimension_semantics=("parallel",)),
    )(x.astype(jnp.float32), w1, b1, wh, bh, wo, bo)

    return out[:N, :dout].astype(jnp.float32)


def init_linear(key, fan_in, fan_out):
    """PyTorch-like init: U(-1/sqrt(fan_in), 1/sqrt(fan_in)).
    Weight returned as (fan_in, fan_out) (= nn.Linear.weight.T)."""
    kw, kb = jax.random.split(key)
    bound = 1.0 / jnp.sqrt(jnp.float32(fan_in))
    w = jax.random.uniform(kw, (fan_in, fan_out), jnp.float32, -bound, bound)
    b = jax.random.uniform(kb, (1, fan_out), jnp.float32, -bound, bound)
    return w, b


def reference_forward(x, params):
    """Pure-JAX f32 reference with B.forward's exact activation pattern
    (unfolded hidden chain, so it also validates the wrapper-side fold)."""
    (w1, b1) = params[0]
    (wo, bo) = params[-1]
    h = jax.nn.leaky_relu(x @ w1 + b1, NEG_SLOPE)
    for (w, b) in params[1:-1]:
        h = h @ w + b
    h = jax.nn.leaky_relu(h, NEG_SLOPE)
    return h @ wo + bo


if __name__ == "__main__":
    network_dim = 4
    data_dim = 3
    hidden_features = 64   # small synthetic size (module default is 256)
    hidden_layers = 3
    batch = 200            # deliberately NOT a multiple of the tile

    key = jax.random.PRNGKey(0)
    keys = jax.random.split(key, hidden_layers + 3)

    params = []
    params.append(init_linear(keys[0], network_dim, hidden_features))              # layer1
    for i in range(hidden_layers):                                                  # hidden chain
        params.append(init_linear(keys[1 + i], hidden_features, hidden_features))
    params.append(init_linear(keys[1 + hidden_layers], hidden_features, data_dim))  # outlayer

    x = jax.random.normal(keys[-1], (batch, network_dim), jnp.float32)

    out = jax.block_until_ready(mlp_forward(x, params))   # auto tm (>=2 tiles)
    ref = reference_forward(x, params)

    assert out.shape == (batch, data_dim)
    rel_err = float(jnp.max(jnp.abs(out - ref)) / (jnp.max(jnp.abs(ref)) + 1e-6))
    assert rel_err < 5e-2, f"mismatch vs f32 reference (bf16 matmuls/store): rel err {rel_err}"

    print("KERNEL_OK")
</pallas_src>

<mosaic_0001>
module attributes {stable_mosaic.version = 11 : i64} {
  func.func @kernel(%arg0: i32, %arg1: memref<128x4xf32, #tpu.memory_space<vmem>>, %arg2: memref<4x64xf32, #tpu.memory_space<vmem>>, %arg3: memref<1x64xf32, #tpu.memory_space<vmem>>, %arg4: memref<64x64xbf16, #tpu.memory_space<vmem>>, %arg5: memref<1x64xf32, #tpu.memory_space<vmem>>, %arg6: memref<64x128xbf16, #tpu.memory_space<vmem>>, %arg7: memref<1x128xf32, #tpu.memory_space<vmem>>, %arg8: memref<128x128xbf16, #tpu.memory_space<vmem>>) attributes {dimension_semantics = [#tpu.dimension_semantics<parallel>], iteration_bounds = array<i64: 2>, scalar_prefetch = 0 : i64, scratch_operands = 0 : i64, tpu.core_type = #tpu.core_type<tc>, window_params = [{transform_indices = @transform_0, window_bounds = array<i64: 128, 4>}, {pipeline_mode = #tpu.pipeline_mode<synchronous>, transform_indices = @transform_1, window_bounds = array<i64: 4, 64>}, {pipeline_mode = #tpu.pipeline_mode<synchronous>, transform_indices = @transform_2, window_bounds = array<i64: 1, 64>}, {pipeline_mode = #tpu.pipeline_mode<synchronous>, transform_indices = @transform_3, window_bounds = array<i64: 64, 64>}, {pipeline_mode = #tpu.pipeline_mode<synchronous>, transform_indices = @transform_4, window_bounds = array<i64: 1, 64>}, {pipeline_mode = #tpu.pipeline_mode<synchronous>, transform_indices = @transform_5, window_bounds = array<i64: 64, 128>}, {pipeline_mode = #tpu.pipeline_mode<synchronous>, transform_indices = @transform_6, window_bounds = array<i64: 1, 128>}, {transform_indices = @transform_7, window_bounds = array<i64: 128, 128>}]} {
    %c0 = arith.constant 0 : index
    %c0_0 = arith.constant 0 : index
    %0 = vector.load %arg1[%c0, %c0_0] : memref<128x4xf32, #tpu.memory_space<vmem>>, vector<128x4xf32>
    %c0_1 = arith.constant 0 : index
    %c0_2 = arith.constant 0 : index
    %1 = vector.load %arg2[%c0_1, %c0_2] : memref<4x64xf32, #tpu.memory_space<vmem>>, vector<4x64xf32>
    %2 = vector.extract_strided_slice %0 {offsets = [0, 0], sizes = [128, 1], strides = [1, 1]} : vector<128x4xf32> to vector<128x1xf32>
    %3 = vector.extract_strided_slice %1 {offsets = [0, 0], sizes = [1, 64], strides = [1, 1]} : vector<4x64xf32> to vector<1x64xf32>
    %4 = vector.broadcast %2 : vector<128x1xf32> to vector<128x64xf32>
    %5 = vector.broadcast %3 : vector<1x64xf32> to vector<128x64xf32>
    %6 = arith.mulf %4, %5 : vector<128x64xf32>
    %7 = vector.extract_strided_slice %0 {offsets = [0, 1], sizes = [128, 1], strides = [1, 1]} : vector<128x4xf32> to vector<128x1xf32>
    %8 = vector.extract_strided_slice %1 {offsets = [1, 0], sizes = [1, 64], strides = [1, 1]} : vector<4x64xf32> to vector<1x64xf32>
    %9 = vector.broadcast %7 : vector<128x1xf32> to vector<128x64xf32>
    %10 = vector.broadcast %8 : vector<1x64xf32> to vector<128x64xf32>
    %11 = arith.mulf %9, %10 : vector<128x64xf32>
    %12 = arith.addf %6, %11 : vector<128x64xf32>
    %13 = vector.extract_strided_slice %0 {offsets = [0, 2], sizes = [128, 1], strides = [1, 1]} : vector<128x4xf32> to vector<128x1xf32>
    %14 = vector.extract_strided_slice %1 {offsets = [2, 0], sizes = [1, 64], strides = [1, 1]} : vector<4x64xf32> to vector<1x64xf32>
    %15 = vector.broadcast %13 : vector<128x1xf32> to vector<128x64xf32>
    %16 = vector.broadcast %14 : vector<1x64xf32> to vector<128x64xf32>
    %17 = arith.mulf %15, %16 : vector<128x64xf32>
    %18 = arith.addf %12, %17 : vector<128x64xf32>
    %19 = vector.extract_strided_slice %0 {offsets = [0, 3], sizes = [128, 1], strides = [1, 1]} : vector<128x4xf32> to vector<128x1xf32>
    %20 = vector.extract_strided_slice %1 {offsets = [3, 0], sizes = [1, 64], strides = [1, 1]} : vector<4x64xf32> to vector<1x64xf32>
    %21 = vector.broadcast %19 : vector<128x1xf32> to vector<128x64xf32>
    %22 = vector.broadcast %20 : vector<1x64xf32> to vector<128x64xf32>
    %23 = arith.mulf %21, %22 : vector<128x64xf32>
    %24 = arith.addf %18, %23 : vector<128x64xf32>
    %c0_3 = arith.constant 0 : index
    %c0_4 = arith.constant 0 : index
    %25 = vector.load %arg3[%c0_3, %c0_4] : memref<1x64xf32, #tpu.memory_space<vmem>>, vector<1x64xf32>
    %26 = vector.broadcast %25 : vector<1x64xf32> to vector<128x64xf32>
    %27 = arith.addf %24, %26 : vector<128x64xf32>
    %cst = arith.constant 0.000000e+00 : f32
    %28 = vector.broadcast %cst : f32 to vector<128x64xf32>
    %29 = arith.cmpf ogt, %27, %28 : vector<128x64xf32>
    %cst_5 = arith.constant 2.000000e-01 : f32
    %30 = vector.broadcast %cst_5 : f32 to vector<128x64xf32>
    %31 = arith.mulf %30, %27 : vector<128x64xf32>
    %32 = arith.select %29, %27, %31 : vector<128x64xi1>, vector<128x64xf32>
    %33 = arith.truncf %32 : vector<128x64xf32> to vector<128x64xbf16>
    %c0_6 = arith.constant 0 : index
    %c0_7 = arith.constant 0 : index
    %34 = vector.load %arg4[%c0_6, %c0_7] : memref<64x64xbf16, #tpu.memory_space<vmem>>, vector<64x64xbf16>
    %cst_8 = arith.constant dense<0.000000e+00> : vector<128x64xf32>
    %35 = tpu.matmul %33, %34, %cst_8 {dimension_numbers = #tpu.dot_dimension_numbers<[1], [0], [0], [1], [0, 0, 1, 1], [], []>} : vector<128x64xbf16>, vector<64x64xbf16>, vector<128x64xf32> -> vector<128x64xf32>
    %c0_9 = arith.constant 0 : index
    %c0_10 = arith.constant 0 : index
    %36 = vector.load %arg5[%c0_9, %c0_10] : memref<1x64xf32, #tpu.memory_space<vmem>>, vector<1x64xf32>
    %37 = vector.broadcast %36 : vector<1x64xf32> to vector<128x64xf32>
    %38 = arith.addf %35, %37 : vector<128x64xf32>
    %cst_11 = arith.constant 0.000000e+00 : f32
    %39 = vector.broadcast %cst_11 : f32 to vector<128x64xf32>
    %40 = arith.cmpf ogt, %38, %39 : vector<128x64xf32>
    %cst_12 = arith.constant 2.000000e-01 : f32
    %41 = vector.broadcast %cst_12 : f32 to vector<128x64xf32>
    %42 = arith.mulf %41, %38 : vector<128x64xf32>
    %43 = arith.select %40, %38, %42 : vector<128x64xi1>, vector<128x64xf32>
    %44 = arith.truncf %43 : vector<128x64xf32> to vector<128x64xbf16>
    %c0_13 = arith.constant 0 : index
    %c0_14 = arith.constant 0 : index
    %45 = vector.load %arg6[%c0_13, %c0_14] : memref<64x128xbf16, #tpu.memory_space<vmem>>, vector<64x128xbf16>
    %cst_15 = arith.constant dense<0.000000e+00> : vector<128x128xf32>
    %46 = tpu.matmul %44, %45, %cst_15 {dimension_numbers = #tpu.dot_dimension_numbers<[1], [0], [0], [1], [0, 0, 1, 1], [], []>} : vector<128x64xbf16>, vector<64x128xbf16>, vector<128x128xf32> -> vector<128x128xf32>
    %c0_16 = arith.constant 0 : index
    %c0_17 = arith.constant 0 : index
    %47 = vector.load %arg7[%c0_16, %c0_17] : memref<1x128xf32, #tpu.memory_space<vmem>>, vector<1x128xf32>
    %48 = vector.broadcast %47 : vector<1x128xf32> to vector<128x128xf32>
    %49 = arith.addf %46, %48 : vector<128x128xf32>
    %50 = arith.truncf %49 : vector<128x128xf32> to vector<128x128xbf16>
    %c0_18 = arith.constant 0 : index
    %c0_19 = arith.constant 0 : index
    %51 = vector.load %arg8[%c0_18, %c0_19] : memref<128x128xbf16, #tpu.memory_space<vmem>>, vector<128x128xbf16>
    tpu.vector_store %arg8[%c0_18, %c0_19], %50 {strides = array<i32>} : memref<128x128xbf16, #tpu.memory_space<vmem>>, vector<128x128xbf16>,
    return
  }
  func.func @transform_0(%arg0: i32) -> (i32, i32) {
    %c0_i32 = arith.constant 0 : i32
    %c0_i32_0 = arith.constant 0 : i32
    return %arg0, %c0_i32 : i32, i32
  }
  func.func @transform_1(%arg0: i32) -> (i32, i32) {
    %c0_i32 = arith.constant 0 : i32
    %c0_i32_0 = arith.constant 0 : i32
    %c0_i32_1 = arith.constant 0 : i32
    return %c0_i32, %c0_i32_0 : i32, i32
  }
  func.func @transform_2(%arg0: i32) -> (i32, i32) {
    %c0_i32 = arith.constant 0 : i32
    %c0_i32_0 = arith.constant 0 : i32
    %c0_i32_1 = arith.constant 0 : i32
    return %c0_i32, %c0_i32_0 : i32, i32
  }
  func.func @transform_3(%arg0: i32) -> (i32, i32) {
    %c0_i32 = arith.constant 0 : i32
    %c0_i32_0 = arith.constant 0 : i32
    %c0_i32_1 = arith.constant 0 : i32
    return %c0_i32, %c0_i32_0 : i32, i32
  }
  func.func @transform_4(%arg0: i32) -> (i32, i32) {
    %c0_i32 = arith.constant 0 : i32
    %c0_i32_0 = arith.constant 0 : i32
    %c0_i32_1 = arith.constant 0 : i32
    return %c0_i32, %c0_i32_0 : i32, i32
  }
  func.func @transform_5(%arg0: i32) -> (i32, i32) {
    %c0_i32 = arith.constant 0 : i32
    %c0_i32_0 = arith.constant 0 : i32
    %c0_i32_1 = arith.constant 0 : i32
    return %c0_i32, %c0_i32_0 : i32, i32
  }
  func.func @transform_6(%arg0: i32) -> (i32, i32) {
    %c0_i32 = arith.constant 0 : i32
    %c0_i32_0 = arith.constant 0 : i32
    %c0_i32_1 = arith.constant 0 : i32
    return %c0_i32, %c0_i32_0 : i32, i32
  }
  func.func @transform_7(%arg0: i32) -> (i32, i32) {
    %c0_i32 = arith.constant 0 : i32
    %c0_i32_0 = arith.constant 0 : i32
    return %arg0, %c0_i32 : i32, i32
  }
}

</mosaic_0001>

<llo_original>
// kernel: tpu_custom_call.1
$region0: #{tpu_custom_call.1}
  #allocation0 [shape = 'u32[]', space=smem, size = 0x4, offset = 0x4, fixed_abs, tag = 'smem constant byte address 0x4 - core index']
  #allocation1 [shape = 'u32[144,128]{1,0:T(1,128)}', space=vmem, size = 0x12000, scoped, tag = 'internal scratch']
  %s0 = inlined_call_operand.vmem [shape: f32[256,4], index: 0, kind: input, shape index: {}]
  %s1 = inlined_call_operand.vmem [shape: f32[4,64], index: 1, kind: input, shape index: {}]
  %s2 = inlined_call_operand.vmem [shape: f32[1,64], index: 2, kind: input, shape index: {}]
  %s3 = inlined_call_operand.vmem [shape: bf16[64,64], index: 3, kind: input, shape index: {}]
  %s4 = inlined_call_operand.vmem [shape: f32[1,64], index: 4, kind: input, shape index: {}]
  %s5 = inlined_call_operand.vmem [shape: bf16[64,128], index: 5, kind: input, shape index: {}]
  %s6 = inlined_call_operand.vmem [shape: f32[1,128], index: 6, kind: input, shape index: {}]
  %s7 = inlined_call_operand.hbm [shape: bf16[256,128], index: 7, kind: output, shape index: {}]
  %s8 = sld [smem:[#allocation0]]
  $region61: #{tpu_custom_call.1} parent=0
    _
  %s10 = ssub.s32 1, %s8
  %s11 = scalar_select 0, %s10, %s8
  $region1: #{tpu_custom_call.1} parent=0
    #allocation2 [shape = 'u8[65536]{0}', space=vmem, size = 0x10000, scoped, tag = 'output window, operand 0']
    #allocation3 [shape = 's32[2]{0}', space=sflag, size = 0x8, scoped, tag = 'scoped memory for tpu_custom_call.1']
    %12 = vsyncpa [#allocation3], 0
    %s13 = scalar_lea.sflag [#allocation3], 1
    %14 = vsyncpa %s13, 0
    loop: start=0, step=1, limit=4
    $region2: #{tpu_custom_call.1} parent=1 // loop_pre_header
      _
    $region3: #{tpu_custom_call.1} parent=1 // loop_header
      %s16 = sphi 0, %s20
      %p17 = scmp.ge.s32.totalorder %s16, 4
      %s26 = sphi 0, %s28
      %s29 = sphi 0, %s26
      %s30 = sphi 0, %s29
      %s46 = sphi 0, %s30
      %s50 = sphi 0, %s50
      %s52 = sphi 0, %s50
      %s53 = sphi 0, %s52
      %s67 = sphi 0, %s53
      %s71 = sphi 0, %s71
      %s73 = sphi 0, %s71
      %s74 = sphi 0, %s73
      %s88 = sphi 0, %s74
      %s92 = sphi 0, %s92
      %s94 = sphi 0, %s92
      %s95 = sphi 0, %s94
      %s109 = sphi 0, %s95
      %s113 = sphi 0, %s113
      %s115 = sphi 0, %s113
      %s116 = sphi 0, %s115
      %s130 = sphi 0, %s116
      %s134 = sphi 0, %s134
      %s136 = sphi 0, %s134
      %s137 = sphi 0, %s136
      %s151 = sphi 0, %s137
      %s155 = sphi 0, %s155
      %s157 = sphi 0, %s155
      %s158 = sphi 0, %s157
      %s172 = sphi 0, %s158
      %s178 = sphi 0, %s180
      %s181 = sphi 0, %s178
      %s182 = sphi 0, %s181
      %s198 = sphi 0, %s182
    $region4: #{tpu_custom_call.1} parent=1 // loop_header_branch
      %19 = sbr.rel (%p17) target = $region8
    $region5: #{tpu_custom_call.1} parent=1 // loop_body
      %s21 = ssub.s32 %s16, 1
      %s22 = ssub.s32 %s16, 2
      %s23 = sadd.s32 %s16, 1
      %s24 = ssub.s32 %s16, %s23
      %p25 = scmp.eq.s32.totalorder %s24, 0
      %s27 = sadd.s32 %s26, 1
      %s28 = scalar_select %p25, %s26, %s27
      %p31 = pneg %p25
      %p32 = scmp.eq.s32.totalorder %s16, 1
      %p33 = por %p31, %p32
      %p34 = scmp.ne.s32.totalorder %s26, %s29
      %p35 = scmp.eq.s32.totalorder %s16, 0
      %p36 = por %p34, %p35
      %p37 = scmp.ne.s32.totalorder %s26, %s29
      %p38 = scmp.eq.s32.totalorder %s21, 1
      %p39 = por %p37, %p38
      %p40 = scmp.ne.s32.totalorder %s29, %s30
      %p41 = scmp.eq.s32.totalorder %s21, 0
      %p42 = por %p40, %p41
      %p43 = scmp.ne.s32.totalorder %s29, %s30
      %p44 = scmp.eq.s32.totalorder %s22, 1
      %p45 = por %p43, %p44
      %p47 = scmp.ne.s32.totalorder %s30, %s46
      %p48 = scmp.eq.s32.totalorder %s22, 0
      %p49 = por %p47, %p48
      %s51 = sadd.s32 %s50, 1
      %p54 = scmp.eq.s32.totalorder %s16, 1
      %p55 = scmp.ne.s32.totalorder %s50, %s52
      %p56 = scmp.eq.s32.totalorder %s16, 0
      %p57 = por %p55, %p56
      %p58 = scmp.ne.s32.totalorder %s50, %s52
      %p59 = scmp.eq.s32.totalorder %s21, 1
      %p60 = por %p58, %p59
      %p61 = scmp.ne.s32.totalorder %s52, %s53
      %p62 = scmp.eq.s32.totalorder %s21, 0
      %p63 = por %p61, %p62
      %p64 = scmp.ne.s32.totalorder %s52, %s53
      %p65 = scmp.eq.s32.totalorder %s22, 1
      %p66 = por %p64, %p65
      %p68 = scmp.ne.s32.totalorder %s53, %s67
      %p69 = scmp.eq.s32.totalorder %s22, 0
      %p70 = por %p68, %p69
      %s72 = sadd.s32 %s71, 1
      %p75 = scmp.eq.s32.totalorder %s16, 1
      %p76 = scmp.ne.s32.totalorder %s71, %s73
      %p77 = scmp.eq.s32.totalorder %s16, 0
      %p78 = por %p76, %p77
      %p79 = scmp.ne.s32.totalorder %s71, %s73
      %p80 = scmp.eq.s32.totalorder %s21, 1
      %p81 = por %p79, %p80
      %p82 = scmp.ne.s32.totalorder %s73, %s74
      %p83 = scmp.eq.s32.totalorder %s21, 0
      %p84 = por %p82, %p83
      %p85 = scmp.ne.s32.totalorder %s73, %s74
      %p86 = scmp.eq.s32.totalorder %s22, 1
      %p87 = por %p85, %p86
      %p89 = scmp.ne.s32.totalorder %s74, %s88
      %p90 = scmp.eq.s32.totalorder %s22, 0
      %p91 = por %p89, %p90
      %s93 = sadd.s32 %s92, 1
      %p96 = scmp.eq.s32.totalorder %s16, 1
      %p97 = scmp.ne.s32.totalorder %s92, %s94
      %p98 = scmp.eq.s32.totalorder %s16, 0
      %p99 = por %p97, %p98
      %p100 = scmp.ne.s32.totalorder %s92, %s94
      %p101 = scmp.eq.s32.totalorder %s21, 1
      %p102 = por %p100, %p101
      %p103 = scmp.ne.s32.totalorder %s94, %s95
      %p104 = scmp.eq.s32.totalorder %s21, 0
      %p105 = por %p103, %p104
      %p106 = scmp.ne.s32.totalorder %s94, %s95
      %p107 = scmp.eq.s32.totalorder %s22, 1
      %p108 = por %p106, %p107
      %p110 = scmp.ne.s32.totalorder %s95, %s109
      %p111 = scmp.eq.s32.totalorder %s22, 0
      %p112 = por %p110, %p111
      %s114 = sadd.s32 %s113, 1
      %p117 = scmp.eq.s32.totalorder %s16, 1
      %p118 = scmp.ne.s32.totalorder %s113, %s115
      %p119 = scmp.eq.s32.totalorder %s16, 0
      %p120 = por %p118, %p119
      %p121 = scmp.ne.s32.totalorder %s113, %s115
      %p122 = scmp.eq.s32.totalorder %s21, 1
      %p123 = por %p121, %p122
      %p124 = scmp.ne.s32.totalorder %s115, %s116
      %p125 = scmp.eq.s32.totalorder %s21, 0
      %p126 = por %p124, %p125
      %p127 = scmp.ne.s32.totalorder %s115, %s116
      %p128 = scmp.eq.s32.totalorder %s22, 1
      %p129 = por %p127, %p128
      %p131 = scmp.ne.s32.totalorder %s116, %s130
      %p132 = scmp.eq.s32.totalorder %s22, 0
      %p133 = por %p131, %p132
      %s135 = sadd.s32 %s134, 1
      %p138 = scmp.eq.s32.totalorder %s16, 1
      %p139 = scmp.ne.s32.totalorder %s134, %s136
      %p140 = scmp.eq.s32.totalorder %s16, 0
      %p141 = por %p139, %p140
      %p142 = scmp.ne.s32.totalorder %s134, %s136
      %p143 = scmp.eq.s32.totalorder %s21, 1
      %p144 = por %p142, %p143
      %p145 = scmp.ne.s32.totalorder %s136, %s137
      %p146 = scmp.eq.s32.totalorder %s21, 0
      %p147 = por %p145, %p146
      %p148 = scmp.ne.s32.totalorder %s136, %s137
      %p149 = scmp.eq.s32.totalorder %s22, 1
      %p150 = por %p148, %p149
      %p152 = scmp.ne.s32.totalorder %s137, %s151
      %p153 = scmp.eq.s32.totalorder %s22, 0
      %p154 = por %p152, %p153
      %s156 = sadd.s32 %s155, 1
      %p159 = scmp.eq.s32.totalorder %s16, 1
      %p160 = scmp.ne.s32.totalorder %s155, %s157
      %p161 = scmp.eq.s32.totalorder %s16, 0
      %p162 = por %p160, %p161
      %p163 = scmp.ne.s32.totalorder %s155, %s157
      %p164 = scmp.eq.s32.totalorder %s21, 1
      %p165 = por %p163, %p164
      %p166 = scmp.ne.s32.totalorder %s157, %s158
      %p167 = scmp.eq.s32.totalorder %s21, 0
      %p168 = por %p166, %p167
      %p169 = scmp.ne.s32.totalorder %s157, %s158
      %p170 = scmp.eq.s32.totalorder %s22, 1
      %p171 = por %p169, %p170
      %p173 = scmp.ne.s32.totalorder %s158, %s172
      %p174 = scmp.eq.s32.totalorder %s22, 0
      %p175 = por %p173, %p174
      %s176 = ssub.s32 %s16, %s23
      %p177 = scmp.eq.s32.totalorder %s176, 0
      %s179 = sadd.s32 %s178, 1
      %s180 = scalar_select %p177, %s178, %s179
      %p183 = pneg %p177
      %p184 = scmp.eq.s32.totalorder %s16, 1
      %p185 = por %p183, %p184
      %p186 = scmp.ne.s32.totalorder %s178, %s181
      %p187 = scmp.eq.s32.totalorder %s16, 0
      %p188 = por %p186, %p187
      %p189 = scmp.ne.s32.totalorder %s178, %s181
      %p190 = scmp.eq.s32.totalorder %s21, 1
      %p191 = por %p189, %p190
      %p192 = scmp.ne.s32.totalorder %s181, %s182
      %p193 = scmp.eq.s32.totalorder %s21, 0
      %p194 = por %p192, %p193
      %p195 = scmp.ne.s32.totalorder %s181, %s182
      %p196 = scmp.eq.s32.totalorder %s22, 1
      %p197 = por %p195, %p196
      %p199 = scmp.ne.s32.totalorder %s182, %s198
      %p200 = scmp.eq.s32.totalorder %s22, 0
      %p201 = por %p199, %p200
      %p202 = scmp.le.s32.totalorder 1, %s16
      %p203 = scmp.lt.s32.totalorder %s16, 3
      %p204 = pnand %p202, %p203
      %p205 = pneg %p204
      // Predicated region
      $region9: #{tpu_custom_call.1} parent=5 // pred_check
        _
      $region10: #{tpu_custom_call.1} parent=5 // pred_check_branch
        %207 = sbr.rel (%p204) target = $region12
      $region11: #{tpu_custom_call.1} parent=5 // pred_region
        %s208 = ssub.s32 %s16, 1
        // Predicated region
        $region13: #{tpu_custom_call.1} parent=11 // pred_check
          %p209 = pneg %p63
        $region14: #{tpu_custom_call.1} parent=11 // pred_check_branch
          %211 = sbr.rel (%p209) target = $region16
        $region15: #{tpu_custom_call.1} parent=11 // pred_region
          _
        $region16: #{tpu_custom_call.1} parent=11 // pred_fallthru
          _
        // Predicated region
        $region17: #{tpu_custom_call.1} parent=11 // pred_check
          %p212 = pneg %p84
        $region18: #{tpu_custom_call.1} parent=11 // pred_check_branch
          %214 = sbr.rel (%p212) target = $region20
        $region19: #{tpu_custom_call.1} parent=11 // pred_region
          _
        $region20: #{tpu_custom_call.1} parent=11 // pred_fallthru
          _
        // Predicated region
        $region21: #{tpu_custom_call.1} parent=11 // pred_check
          %p215 = pneg %p105
        $region22: #{tpu_custom_call.1} parent=11 // pred_check_branch
          %217 = sbr.rel (%p215) target = $region24
        $region23: #{tpu_custom_call.1} parent=11 // pred_region
          _
        $region24: #{tpu_custom_call.1} parent=11 // pred_fallthru
          _
        // Predicated region
        $region25: #{tpu_custom_call.1} parent=11 // pred_check
          %p218 = pneg %p126
        $region26: #{tpu_custom_call.1} parent=11 // pred_check_branch
          %220 = sbr.rel (%p218) target = $region28
        $region27: #{tpu_custom_call.1} parent=11 // pred_region
          _
        $region28: #{tpu_custom_call.1} parent=11 // pred_fallthru
          _
        // Predicated region
        $region29: #{tpu_custom_call.1} parent=11 // pred_check
          %p221 = pneg %p147
        $region30: #{tpu_custom_call.1} parent=11 // pred_check_branch
          %223 = sbr.rel (%p221) target = $region32
        $region31: #{tpu_custom_call.1} parent=11 // pred_region
          _
        $region32: #{tpu_custom_call.1} parent=11 // pred_fallthru
          _
        // Predicated region
        $region33: #{tpu_custom_call.1} parent=11 // pred_check
          %p224 = pneg %p168
        $region34: #{tpu_custom_call.1} parent=11 // pred_check_branch
          %226 = sbr.rel (%p224) target = $region36
        $region35: #{tpu_custom_call.1} parent=11 // pred_region
          _
        $region36: #{tpu_custom_call.1} parent=11 // pred_fallthru
          _
      $region12: #{tpu_custom_call.1} parent=5 // pred_fallthru
        _
      %p227 = scmp.lt.s32.totalorder %s16, 2
      // Predicated region
      $region37: #{tpu_custom_call.1} parent=5 // pred_check
        %p228 = pneg %p227
      $region38: #{tpu_custom_call.1} parent=5 // pred_check_branch
        %230 = sbr.rel (%p228) target = $region40
      $region39: #{tpu_custom_call.1} parent=5 // pred_region
        // Predicated region
        $region41: #{tpu_custom_call.1} parent=39 // pred_check
          %p231 = pneg %p36
        $region42: #{tpu_custom_call.1} parent=39 // pred_check_branch
          %233 = sbr.rel (%p231) target = $region44
        $region43: #{tpu_custom_call.1} parent=39 // pred_region
          %s234 = smul.u32 16, %s16
          %p235 = scmp.lt.s32.totalorder %s234, 31
          %s236 = scalar_select %p235, %s234, 31
          %s237 = smul.addr %s236, 8
          %s238 = scalar_lea.vmem %s0, %s237
          %s239 = smul.u32 16, %s16
        $region44: #{tpu_custom_call.1} parent=39 // pred_fallthru
          _
      $region40: #{tpu_custom_call.1} parent=5 // pred_fallthru
        _
      %p240 = scmp.le.s32.totalorder 1, %s16
      %p241 = scmp.lt.s32.totalorder %s16, 3
      %p242 = pnand %p240, %p241
      %p243 = pneg %p242
      // Predicated region
      $region45: #{tpu_custom_call.1} parent=5 // pred_check
        _
      $region46: #{tpu_custom_call.1} parent=5 // pred_check_branch
        %245 = sbr.rel (%p242) target = $region48
      $region47: #{tpu_custom_call.1} parent=5 // pred_region
        %s246 = ssub.s32 %s16, 1
        %s247 = smul.u32 16, %s21
        %p248 = scmp.lt.s32.totalorder %s247, 31
        %s249 = scalar_select %p248, %s247, 31
        %s250 = smul.addr %s249, 8
        %s251 = scalar_lea.vmem %s0, %s250
        %p252 = pneg %p42
        %p253 = pneg %p39
        %p254 = pneg %p63
        %p255 = pneg %p60
        %p256 = pneg %p84
        %p257 = pneg %p81
        %p258 = pneg %p105
        %p259 = pneg %p102
        %p260 = pneg %p126
        %p261 = pneg %p123
        %p262 = pneg %p147
        %p263 = pneg %p144
        %p264 = pneg %p168
        %p265 = pneg %p165
        %p266 = pneg %p194
        %p267 = pneg %p191
        %s268 = sand.u32 %s181, 1
        %s269 = scalar_lea.sflag [#allocation3], %s268
        %s270 = sand.u32 %s181, 1
        %s271 = smul.addr %s270, 64
        %s272 = scalar_lea.vmem [#allocation2], %s271
        %s273 = smul.u32 16, %s21
        %p274 = scmp.lt.s32.totalorder %s273, 31
        %s275 = scalar_select %p274, %s273, 31
        %s276 = smul.addr %s275, 8
        %s277 = scalar_lea.vmem %s0, %s276
        %s278 = smul.u32 16, %s21
        %s279 = smul.u32 16, %s21
        %v281 = vld [vmem:[%s277] sm:$0xff]
        %v282 = vld [vmem:[%s277 + $0x8] sm:$0xff]
        %v283 = vld [vmem:[%s277 + $0x10] sm:$0xff]
        %v284 = vld [vmem:[%s277 + $0x18] sm:$0xff]
        %v285 = vld [vmem:[%s277 + $0x20] sm:$0xff]
        %v286 = vld [vmem:[%s277 + $0x28] sm:$0xff]
        %v287 = vld [vmem:[%s277 + $0x30] sm:$0xff]
        %v288 = vld [vmem:[%s277 + $0x38] sm:$0xff]
        %v289 = vld [vmem:[%s277 + $0x40] sm:$0xff]
        %v290 = vld [vmem:[%s277 + $0x48] sm:$0xff]
        %v291 = vld [vmem:[%s277 + $0x50] sm:$0xff]
        %v292 = vld [vmem:[%s277 + $0x58] sm:$0xff]
        %v293 = vld [vmem:[%s277 + $0x60] sm:$0xff]
        %v294 = vld [vmem:[%s277 + $0x68] sm:$0xff]
        %v295 = vld [vmem:[%s277 + $0x70] sm:$0xff]
        %v296 = vld [vmem:[%s277 + $0x78] sm:$0xff]
        %v297 = vld [vmem:[%s1] sm:$0xf]
        %299 = vset.pattern.permute.xlu0 0
        %300 = vperm.xlu0 %299, %v281
        %v301 = vpop.permute.xlu0 %300
        %304 = vset.pattern.permute.xlu0 0
        %305 = vperm.xlu0 %304, %v282
        %v306 = vpop.permute.xlu0 %305
        %309 = vset.pattern.permute.xlu0 0
        %310 = vperm.xlu0 %309, %v283
        %v311 = vpop.permute.xlu0 %310
        %314 = vset.pattern.permute.xlu0 0
        %315 = vperm.xlu0 %314, %v284
        %v316 = vpop.permute.xlu0 %315
        %319 = vset.pattern.permute.xlu0 0
        %320 = vperm.xlu0 %319, %v285
        %v321 = vpop.permute.xlu0 %320
        %324 = vset.pattern.permute.xlu0 0
        %325 = vperm.xlu0 %324, %v286
        %v326 = vpop.permute.xlu0 %325
        %329 = vset.pattern.permute.xlu0 0
        %330 = vperm.xlu0 %329, %v287
        %v331 = vpop.permute.xlu0 %330
        %334 = vset.pattern.permute.xlu0 0
        %335 = vperm.xlu0 %334, %v288
        %v336 = vpop.permute.xlu0 %335
        %339 = vset.pattern.permute.xlu0 0
        %340 = vperm.xlu0 %339, %v289
        %v341 = vpop.permute.xlu0 %340
        %344 = vset.pattern.permute.xlu0 0
        %345 = vperm.xlu0 %344, %v290
        %v346 = vpop.permute.xlu0 %345
        %349 = vset.pattern.permute.xlu0 0
        %350 = vperm.xlu0 %349, %v291
        %v351 = vpop.permute.xlu0 %350
        %354 = vset.pattern.permute.xlu0 0
        %355 = vperm.xlu0 %354, %v292
        %v356 = vpop.permute.xlu0 %355
        %359 = vset.pattern.permute.xlu0 0
        %360 = vperm.xlu0 %359, %v293
        %v361 = vpop.permute.xlu0 %360
        %364 = vset.pattern.permute.xlu0 0
        %365 = vperm.xlu0 %364, %v294
        %v366 = vpop.permute.xlu0 %365
        %369 = vset.pattern.permute.xlu0 0
        %370 = vperm.xlu0 %369, %v295
        %v371 = vpop.permute.xlu0 %370
        %374 = vset.pattern.permute.xlu0 0
        %375 = vperm.xlu0 %374, %v296
        %v376 = vpop.permute.xlu0 %375
        %v378 = vlaneseq
        %v379 = vshrl.u32 %v378, 7
        %v380 = vsub.s32 0, %v379
        %v381 = vrot.slane %v297, %v380
        %v382 = vmul.f32 %v301, %v381
        %v383 = vmul.f32 %v306, %v381
        %v384 = vmul.f32 %v311, %v381
        %v385 = vmul.f32 %v316, %v381
        %v386 = vmul.f32 %v321, %v381
        %v387 = vmul.f32 %v326, %v381
        %v388 = vmul.f32 %v331, %v381
        %v389 = vmul.f32 %v336, %v381
        %v390 = vmul.f32 %v341, %v381
        %v391 = vmul.f32 %v346, %v381
        %v392 = vmul.f32 %v351, %v381
        %v393 = vmul.f32 %v356, %v381
        %v394 = vmul.f32 %v361, %v381
        %v395 = vmul.f32 %v366, %v381
        %v396 = vmul.f32 %v371, %v381
        %v397 = vmul.f32 %v376, %v381
        %398 = vset.pattern.permute.xlu0 1
        %399 = vperm.xlu0 %398, %v281
        %v400 = vpop.permute.xlu0 %399
        %402 = vset.pattern.permute.xlu0 1
        %403 = vperm.xlu0 %402, %v282
        %v404 = vpop.permute.xlu0 %403
        %406 = vset.pattern.permute.xlu0 1
        %407 = vperm.xlu0 %406, %v283
        %v408 = vpop.permute.xlu0 %407
        %410 = vset.pattern.permute.xlu0 1
        %411 = vperm.xlu0 %410, %v284
        %v412 = vpop.permute.xlu0 %411
        %414 = vset.pattern.permute.xlu0 1
        %415 = vperm.xlu0 %414, %v285
        %v416 = vpop.permute.xlu0 %415
        %418 = vset.pattern.permute.xlu0 1
        %419 = vperm.xlu0 %418, %v286
        %v420 = vpop.permute.xlu0 %419
        %422 = vset.pattern.permute.xlu0 1
        %423 = vperm.xlu0 %422, %v287
        %v424 = vpop.permute.xlu0 %423
        %426 = vset.pattern.permute.xlu0 1
        %427 = vperm.xlu0 %426, %v288
        %v428 = vpop.permute.xlu0 %427
        %430 = vset.pattern.permute.xlu0 1
        %431 = vperm.xlu0 %430, %v289
        %v432 = vpop.permute.xlu0 %431
        %434 = vset.pattern.permute.xlu0 1
        %435 = vperm.xlu0 %434, %v290
        %v436 = vpop.permute.xlu0 %435
        %438 = vset.pattern.permute.xlu0 1
        %439 = vperm.xlu0 %438, %v291
        %v440 = vpop.permute.xlu0 %439
        %442 = vset.pattern.permute.xlu0 1
        %443 = vperm.xlu0 %442, %v292
        %v444 = vpop.permute.xlu0 %443
        %446 = vset.pattern.permute.xlu0 1
        %447 = vperm.xlu0 %446, %v293
        %v448 = vpop.permute.xlu0 %447
        %450 = vset.pattern.permute.xlu0 1
        %451 = vperm.xlu0 %450, %v294
        %v452 = vpop.permute.xlu0 %451
        %454 = vset.pattern.permute.xlu0 1
        %455 = vperm.xlu0 %454, %v295
        %v456 = vpop.permute.xlu0 %455
        %458 = vset.pattern.permute.xlu0 1
        %459 = vperm.xlu0 %458, %v296
        %v460 = vpop.permute.xlu0 %459
        %v462 = vlaneseq
        %v463 = vshrl.u32 %v462, 7
        %v464 = vsub.s32 1, %v463
        %v465 = vrot.slane %v297, %v464
        %v466 = vmul.f32 %v400, %v465
        %v467 = vmul.f32 %v404, %v465
        %v468 = vmul.f32 %v408, %v465
        %v469 = vmul.f32 %v412, %v465
        %v470 = vmul.f32 %v416, %v465
        %v471 = vmul.f32 %v420, %v465
        %v472 = vmul.f32 %v424, %v465
        %v473 = vmul.f32 %v428, %v465
        %v474 = vmul.f32 %v432, %v465
        %v475 = vmul.f32 %v436, %v465
        %v476 = vmul.f32 %v440, %v465
        %v477 = vmul.f32 %v444, %v465
        %v478 = vmul.f32 %v448, %v465
        %v479 = vmul.f32 %v452, %v465
        %v480 = vmul.f32 %v456, %v465
        %v481 = vmul.f32 %v460, %v465
        %v482 = vadd.f32 %v382, %v466
        %v483 = vadd.f32 %v383, %v467
        %v484 = vadd.f32 %v384, %v468
        %v485 = vadd.f32 %v385, %v469
        %v486 = vadd.f32 %v386, %v470
        %v487 = vadd.f32 %v387, %v471
        %v488 = vadd.f32 %v388, %v472
        %v489 = vadd.f32 %v389, %v473
        %v490 = vadd.f32 %v390, %v474
        %v491 = vadd.f32 %v391, %v475
        %v492 = vadd.f32 %v392, %v476
        %v493 = vadd.f32 %v393, %v477
        %v494 = vadd.f32 %v394, %v478
        %v495 = vadd.f32 %v395, %v479
        %v496 = vadd.f32 %v396, %v480
        %v497 = vadd.f32 %v397, %v481
        %498 = vset.pattern.permute.xlu0 2
        %499 = vperm.xlu0 %498, %v281
        %v500 = vpop.permute.xlu0 %499
        %502 = vset.pattern.permute.xlu0 2
        %503 = vperm.xlu0 %502, %v282
        %v504 = vpop.permute.xlu0 %503
        %506 = vset.pattern.permute.xlu0 2
        %507 = vperm.xlu0 %506, %v283
        %v508 = vpop.permute.xlu0 %507
        %510 = vset.pattern.permute.xlu0 2
        %511 = vperm.xlu0 %510, %v284
        %v512 = vpop.permute.xlu0 %511
        %514 = vset.pattern.permute.xlu0 2
        %515 = vperm.xlu0 %514, %v285
        %v516 = vpop.permute.xlu0 %515
        %518 = vset.pattern.permute.xlu0 2
        %519 = vperm.xlu0 %518, %v286
        %v520 = vpop.permute.xlu0 %519
        %522 = vset.pattern.permute.xlu0 2
        %523 = vperm.xlu0 %522, %v287
        %v524 = vpop.permute.xlu0 %523
        %526 = vset.pattern.permute.xlu0 2
        %527 = vperm.xlu0 %526, %v288
        %v528 = vpop.permute.xlu0 %527
        %530 = vset.pattern.permute.xlu0 2
        %531 = vperm.xlu0 %530, %v289
        %v532 = vpop.permute.xlu0 %531
        %534 = vset.pattern.permute.xlu0 2
        %535 = vperm.xlu0 %534, %v290
        %v536 = vpop.permute.xlu0 %535
        %538 = vset.pattern.permute.xlu0 2
        %539 = vperm.xlu0 %538, %v291
        %v540 = vpop.permute.xlu0 %539
        %542 = vset.pattern.permute.xlu0 2
        %543 = vperm.xlu0 %542, %v292
        %v544 = vpop.permute.xlu0 %543
        %546 = vset.pattern.permute.xlu0 2
        %547 = vperm.xlu0 %546, %v293
        %v548 = vpop.permute.xlu0 %547
        %550 = vset.pattern.permute.xlu0 2
        %551 = vperm.xlu0 %550, %v294
        %v552 = vpop.permute.xlu0 %551
        %554 = vset.pattern.permute.xlu0 2
        %555 = vperm.xlu0 %554, %v295
        %v556 = vpop.permute.xlu0 %555
        %558 = vset.pattern.permute.xlu0 2
        %559 = vperm.xlu0 %558, %v296
        %v560 = vpop.permute.xlu0 %559
        %v562 = vlaneseq
        %v563 = vshrl.u32 %v562, 7
        %v564 = vsub.s32 2, %v563
        %v565 = vrot.slane %v297, %v564
        %v566 = vmul.f32 %v500, %v565
        %v567 = vmul.f32 %v504, %v565
        %v568 = vmul.f32 %v508, %v565
        %v569 = vmul.f32 %v512, %v565
        %v570 = vmul.f32 %v516, %v565
        %v571 = vmul.f32 %v520, %v565
        %v572 = vmul.f32 %v524, %v565
        %v573 = vmul.f32 %v528, %v565
        %v574 = vmul.f32 %v532, %v565
        %v575 = vmul.f32 %v536, %v565
        %v576 = vmul.f32 %v540, %v565
        %v577 = vmul.f32 %v544, %v565
        %v578 = vmul.f32 %v548, %v565
        %v579 = vmul.f32 %v552, %v565
        %v580 = vmul.f32 %v556, %v565
        %v581 = vmul.f32 %v560, %v565
        %v582 = vadd.f32 %v482, %v566
        %v583 = vadd.f32 %v483, %v567
        %v584 = vadd.f32 %v484, %v568
        %v585 = vadd.f32 %v485, %v569
        %v586 = vadd.f32 %v486, %v570
        %v587 = vadd.f32 %v487, %v571
        %v588 = vadd.f32 %v488, %v572
        %v589 = vadd.f32 %v489, %v573
        %v590 = vadd.f32 %v490, %v574
        %v591 = vadd.f32 %v491, %v575
        %v592 = vadd.f32 %v492, %v576
        %v593 = vadd.f32 %v493, %v577
        %v594 = vadd.f32 %v494, %v578
        %v595 = vadd.f32 %v495, %v579
        %v596 = vadd.f32 %v496, %v580
        %v597 = vadd.f32 %v497, %v581
        %598 = vset.pattern.permute.xlu0 3
        %599 = vperm.xlu0 %598, %v281
        %v600 = vpop.permute.xlu0 %599
        %602 = vset.pattern.permute.xlu0 3
        %603 = vperm.xlu0 %602, %v282
        %v604 = vpop.permute.xlu0 %603
        %606 = vset.pattern.permute.xlu0 3
        %607 = vperm.xlu0 %606, %v283
        %v608 = vpop.permute.xlu0 %607
        %610 = vset.pattern.permute.xlu0 3
        %611 = vperm.xlu0 %610, %v284
        %v612 = vpop.permute.xlu0 %611
        %614 = vset.pattern.permute.xlu0 3
        %615 = vperm.xlu0 %614, %v285
        %v616 = vpop.permute.xlu0 %615
        %618 = vset.pattern.permute.xlu0 3
        %619 = vperm.xlu0 %618, %v286
        %v620 = vpop.permute.xlu0 %619
        %622 = vset.pattern.permute.xlu0 3
        %623 = vperm.xlu0 %622, %v287
        %v624 = vpop.permute.xlu0 %623
        %626 = vset.pattern.permute.xlu0 3
        %627 = vperm.xlu0 %626, %v288
        %v628 = vpop.permute.xlu0 %627
        %630 = vset.pattern.permute.xlu0 3
        %631 = vperm.xlu0 %630, %v289
        %v632 = vpop.permute.xlu0 %631
        %634 = vset.pattern.permute.xlu0 3
        %635 = vperm.xlu0 %634, %v290
        %v636 = vpop.permute.xlu0 %635
        %638 = vset.pattern.permute.xlu0 3
        %639 = vperm.xlu0 %638, %v291
        %v640 = vpop.permute.xlu0 %639
        %642 = vset.pattern.permute.xlu0 3
        %643 = vperm.xlu0 %642, %v292
        %v644 = vpop.permute.xlu0 %643
        %646 = vset.pattern.permute.xlu0 3
        %647 = vperm.xlu0 %646, %v293
        %v648 = vpop.permute.xlu0 %647
        %650 = vset.pattern.permute.xlu0 3
        %651 = vperm.xlu0 %650, %v294
        %v652 = vpop.permute.xlu0 %651
        %654 = vset.pattern.permute.xlu0 3
        %655 = vperm.xlu0 %654, %v295
        %v656 = vpop.permute.xlu0 %655
        %658 = vset.pattern.permute.xlu0 3
        %659 = vperm.xlu0 %658, %v296
        %v660 = vpop.permute.xlu0 %659
        %v662 = vlaneseq
        %v663 = vshrl.u32 %v662, 7
        %v664 = vsub.s32 3, %v663
        %v665 = vrot.slane %v297, %v664
        %v666 = vmul.f32 %v600, %v665
        %v667 = vmul.f32 %v604, %v665
        %v668 = vmul.f32 %v608, %v665
        %v669 = vmul.f32 %v612, %v665
        %v670 = vmul.f32 %v616, %v665
        %v671 = vmul.f32 %v620, %v665
        %v672 = vmul.f32 %v624, %v665
        %v673 = vmul.f32 %v628, %v665
        %v674 = vmul.f32 %v632, %v665
        %v675 = vmul.f32 %v636, %v665
        %v676 = vmul.f32 %v640, %v665
        %v677 = vmul.f32 %v644, %v665
        %v678 = vmul.f32 %v648, %v665
        %v679 = vmul.f32 %v652, %v665
        %v680 = vmul.f32 %v656, %v665
        %v681 = vmul.f32 %v660, %v665
        %v682 = vadd.f32 %v582, %v666
        %v683 = vadd.f32 %v583, %v667
        %v684 = vadd.f32 %v584, %v668
        %v685 = vadd.f32 %v585, %v669
        %v686 = vadd.f32 %v586, %v670
        %v687 = vadd.f32 %v587, %v671
        %v688 = vadd.f32 %v588, %v672
        %v689 = vadd.f32 %v589, %v673
        %v690 = vadd.f32 %v590, %v674
        %v691 = vadd.f32 %v591, %v675
        %v692 = vadd.f32 %v592, %v676
        %v693 = vadd.f32 %v593, %v677
        %v694 = vadd.f32 %v594, %v678
        %v695 = vadd.f32 %v595, %v679
        %v696 = vadd.f32 %v596, %v680
        %v697 = vadd.f32 %v597, %v681
        %v698 = vld [vmem:[%s2] sm:$0x1]
        %v700 = vlaneseq
        %v701 = vshrl.u32 %v700, 7
        %v702 = vsub.s32 0, %v701
        %v703 = vrot.slane %v698, %v702
        %v705 = vadd.f32 %v682, %v703
        %v706 = vadd.f32 %v683, %v703
        %v707 = vadd.f32 %v684, %v703
        %v708 = vadd.f32 %v685, %v703
        %v709 = vadd.f32 %v686, %v703
        %v710 = vadd.f32 %v687, %v703
        %v711 = vadd.f32 %v688, %v703
        %v712 = vadd.f32 %v689, %v703
        %v713 = vadd.f32 %v690, %v703
        %v714 = vadd.f32 %v691, %v703
        %v715 = vadd.f32 %v692, %v703
        %v716 = vadd.f32 %v693, %v703
        %v717 = vadd.f32 %v694, %v703
        %v718 = vadd.f32 %v695, %v703
        %v719 = vadd.f32 %v696, %v703
        %v720 = vadd.f32 %v697, %v703
        %vm721 = vcmp.gt.f32.partialorder %v705, 0.0
        %vm722 = vcmp.gt.f32.partialorder %v706, 0.0
        %vm723 = vcmp.gt.f32.partialorder %v707, 0.0
        %vm724 = vcmp.gt.f32.partialorder %v708, 0.0
        %vm725 = vcmp.gt.f32.partialorder %v709, 0.0
        %vm726 = vcmp.gt.f32.partialorder %v710, 0.0
        %vm727 = vcmp.gt.f32.partialorder %v711, 0.0
        %vm728 = vcmp.gt.f32.partialorder %v712, 0.0
        %vm729 = vcmp.gt.f32.partialorder %v713, 0.0
        %vm730 = vcmp.gt.f32.partialorder %v714, 0.0
        %vm731 = vcmp.gt.f32.partialorder %v715, 0.0
        %vm732 = vcmp.gt.f32.partialorder %v716, 0.0
        %vm733 = vcmp.gt.f32.partialorder %v717, 0.0
        %vm734 = vcmp.gt.f32.partialorder %v718, 0.0
        %vm735 = vcmp.gt.f32.partialorder %v719, 0.0
        %vm736 = vcmp.gt.f32.partialorder %v720, 0.0
        %v737 = vmul.f32 %v705, 0.2
        %v738 = vmul.f32 %v706, 0.2
        %v739 = vmul.f32 %v707, 0.2
        %v740 = vmul.f32 %v708, 0.2
        %v741 = vmul.f32 %v709, 0.2
        %v742 = vmul.f32 %v710, 0.2
        %v743 = vmul.f32 %v711, 0.2
        %v744 = vmul.f32 %v712, 0.2
        %v745 = vmul.f32 %v713, 0.2
        %v746 = vmul.f32 %v714, 0.2
        %v747 = vmul.f32 %v715, 0.2
        %v748 = vmul.f32 %v716, 0.2
        %v749 = vmul.f32 %v717, 0.2
        %v750 = vmul.f32 %v718, 0.2
        %v751 = vmul.f32 %v719, 0.2
        %v752 = vmul.f32 %v720, 0.2
        %v753 = vsel %vm721, %v705, %v737
        %v754 = vsel %vm722, %v706, %v738
        %v755 = vsel %vm723, %v707, %v739
        %v756 = vsel %vm724, %v708, %v740
        %v757 = vsel %vm725, %v709, %v741
        %v758 = vsel %vm726, %v710, %v742
        %v759 = vsel %vm727, %v711, %v743
        %v760 = vsel %vm728, %v712, %v744
        %v761 = vsel %vm729, %v713, %v745
        %v762 = vsel %vm730, %v714, %v746
        %v763 = vsel %vm731, %v715, %v747
        %v764 = vsel %vm732, %v716, %v748
        %v765 = vsel %vm733, %v717, %v749
        %v766 = vsel %vm734, %v718, %v750
        %v767 = vsel %vm735, %v719, %v751
        %v768 = vsel %vm736, %v720, %v752
        %v769 = vpack.c.bf16 %v754, %v753
        %v770 = vpack.c.bf16 %v756, %v755
        %v771 = vpack.c.bf16 %v758, %v757
        %v772 = vpack.c.bf16 %v760, %v759
        %v773 = vpack.c.bf16 %v762, %v761
        %v774 = vpack.c.bf16 %v764, %v763
        %v775 = vpack.c.bf16 %v766, %v765
        %v776 = vpack.c.bf16 %v768, %v767
        %v777 = vld [vmem:[%s3] sm:$0xf]
        %v778 = vld [vmem:[%s3 + $0x4] sm:$0xf]
        %v779 = vld [vmem:[%s3 + $0x8] sm:$0xf]
        %v780 = vld [vmem:[%s3 + $0xc] sm:$0xf]
        %v781 = vld [vmem:[%s3 + $0x10] sm:$0xf]
        %v782 = vld [vmem:[%s3 + $0x14] sm:$0xf]
        %v783 = vld [vmem:[%s3 + $0x18] sm:$0xf]
        %v784 = vld [vmem:[%s3 + $0x1c] sm:$0xf]
        %v785 = vld [vmem:[%s4] sm:$0x1]
        %v787 = vlaneseq
        %v788 = vshrl.u32 %v787, 7
        %v789 = vsub.s32 0, %v788
        %v790 = vrot.slane %v785, %v789
        %v800 = vunpack.c.l.b16 %v777
        %v801 = vunpack.c.l.b16 %v778
        %v802 = vunpack.c.l.b16 %v779
        %v803 = vunpack.c.l.b16 %v780
        %v804 = vunpack.c.l.b16 %v781
        %v805 = vunpack.c.l.b16 %v782
        %v806 = vunpack.c.l.b16 %v783
        %v807 = vunpack.c.l.b16 %v784
        %v808 = vpack.c.b16 %v801, %v800
        %v809 = vpack.c.b16 %v803, %v802
        %v810 = vpack.c.b16 %v805, %v804
        %v811 = vpack.c.b16 %v807, %v806
        %vm816 = vcmask 523264
        %v818 = vsel %vm816, %v769, 0
        %v821 = vsel %vm816, %v770, 0
        %v824 = vsel %vm816, %v771, 0
        %v827 = vsel %vm816, %v772, 0
        %v830 = vsel %vm816, %v773, 0
        %v833 = vsel %vm816, %v774, 0
        %v836 = vsel %vm816, %v775, 0
        %v839 = vsel %vm816, %v776, 0
        %841 = vmatprep.subr.bf16.mxu0 0
        %842 = vmatpush1.bf16.msra.mxu0 %v808
        %843 = vmatprep.subr.bf16.mxu0 0
        %844 = vmatpush1.bf16.msra.mxu0 %v809
        %845 = vmatprep.subr.bf16.mxu0 0
        %846 = vmatpush1.bf16.msra.mxu0 %v810
        %847 = vmatprep.subr.bf16.mxu0 0
        %848 = vmatpush1.bf16.msra.mxu0 %v811
        %849 = vmatprep.subr.bf16.mxu0 0
        %850 = vmatpush1.bf16.msra.mxu0 0
        %851 = vmatprep.subr.bf16.mxu0 0
        %852 = vmatpush1.bf16.msra.mxu0 0
        %853 = vmatprep.subr.bf16.mxu0 0
        %854 = vmatpush1.bf16.msra.mxu0 0
        %855 = vmatprep.subr.bf16.mxu0 0
        %856 = vmatpush1.bf16.msra.mxu0 0
        %857 = vmatprep.subr.bf16.mxu0 0
        %858 = vmatpush1.bf16.msra.mxu0 0
        %859 = vmatprep.subr.bf16.mxu0 0
        %860 = vmatpush1.bf16.msra.mxu0 0
        %861 = vmatprep.subr.bf16.mxu0 0
        %862 = vmatpush1.bf16.msra.mxu0 0
        %863 = vmatprep.subr.bf16.mxu0 0
        %864 = vmatpush1.bf16.msra.mxu0 0
        %865 = vmatprep.subr.bf16.mxu0 0
        %866 = vmatpush1.bf16.msra.mxu0 0
        %867 = vmatprep.subr.bf16.mxu0 0
        %868 = vmatpush1.bf16.msra.mxu0 0
        %869 = vmatprep.subr.bf16.mxu0 0
        %870 = vmatpush1.bf16.msra.mxu0 0
        %871 = vmatprep.subr.bf16.mxu0 0
        %872 = vmatpush1.bf16.msra.mxu0 0
        %873 = vmatprep.mubr.bf16.mxu0 0
        %874 = vmatmul.mubr.bf16.gmra.mrb[0].mxu0 %v818
        %v875 = vpop.f32.mrb[0].mxu0
        %v876 = vadd.f32 %v790, %v875
        %v877 = vpop.f32.mrb[0].mxu0
        %v878 = vpop.f32.mrb[0].mxu0
        %v879 = vadd.f32 %v790, %v878
        %v880 = vpop.f32.mrb[0].mxu0
        %881 = vmatprep.mubr.bf16.mxu0 0
        %882 = vmatmul.mubr.bf16.gmra.mrb[0].mxu0 %v821
        %v883 = vpop.f32.mrb[0].mxu0
        %v884 = vadd.f32 %v790, %v883
        %v885 = vpop.f32.mrb[0].mxu0
        %v886 = vpop.f32.mrb[0].mxu0
        %v887 = vadd.f32 %v790, %v886
        %v888 = vpop.f32.mrb[0].mxu0
        %889 = vmatprep.mubr.bf16.mxu0 0
        %890 = vmatmul.mubr.bf16.gmra.mrb[0].mxu0 %v824
        %v891 = vpop.f32.mrb[0].mxu0
        %v892 = vadd.f32 %v790, %v891
        %v893 = vpop.f32.mrb[0].mxu0
        %v894 = vpop.f32.mrb[0].mxu0
        %v895 = vadd.f32 %v790, %v894
        %v896 = vpop.f32.mrb[0].mxu0
        %897 = vmatprep.mubr.bf16.mxu0 0
        %898 = vmatmul.mubr.bf16.gmra.mrb[0].mxu0 %v827
        %v899 = vpop.f32.mrb[0].mxu0
        %v900 = vadd.f32 %v790, %v899
        %v901 = vpop.f32.mrb[0].mxu0
        %v902 = vpop.f32.mrb[0].mxu0
        %v903 = vadd.f32 %v790, %v902
        %v904 = vpop.f32.mrb[0].mxu0
        %905 = vmatprep.mubr.bf16.mxu0 0
        %906 = vmatmul.mubr.bf16.gmra.mrb[0].mxu0 %v830
        %v907 = vpop.f32.mrb[0].mxu0
        %v908 = vadd.f32 %v790, %v907
        %v909 = vpop.f32.mrb[0].mxu0
        %v910 = vpop.f32.mrb[0].mxu0
        %v911 = vadd.f32 %v790, %v910
        %v912 = vpop.f32.mrb[0].mxu0
        %913 = vmatprep.mubr.bf16.mxu0 0
        %914 = vmatmul.mubr.bf16.gmra.mrb[0].mxu0 %v833
        %v915 = vpop.f32.mrb[0].mxu0
        %v916 = vadd.f32 %v790, %v915
        %v917 = vpop.f32.mrb[0].mxu0
        %v918 = vpop.f32.mrb[0].mxu0
        %v919 = vadd.f32 %v790, %v918
        %v920 = vpop.f32.mrb[0].mxu0
        %921 = vmatprep.mubr.bf16.mxu0 0
        %922 = vmatmul.mubr.bf16.gmra.mrb[0].mxu0 %v836
        %v923 = vpop.f32.mrb[0].mxu0
        %v924 = vadd.f32 %v790, %v923
        %v925 = vpop.f32.mrb[0].mxu0
        %v926 = vpop.f32.mrb[0].mxu0
        %v927 = vadd.f32 %v790, %v926
        %v928 = vpop.f32.mrb[0].mxu0
        %929 = vmatprep.mubr.bf16.mxu0 0
        %930 = vmatmul.mubr.bf16.gmra.mrb[0].mxu0 %v839
        %v931 = vpop.f32.mrb[0].mxu0
        %v932 = vadd.f32 %v790, %v931
        %v933 = vpop.f32.mrb[0].mxu0
        %v934 = vpop.f32.mrb[0].mxu0
        %v935 = vadd.f32 %v790, %v934
        %v936 = vpop.f32.mrb[0].mxu0
        %937 = vdwg.mxu0
        %vm938 = vcmp.gt.f32.partialorder %v876, 0.0
        %vm939 = vcmp.gt.f32.partialorder %v879, 0.0
        %vm940 = vcmp.gt.f32.partialorder %v884, 0.0
        %vm941 = vcmp.gt.f32.partialorder %v887, 0.0
        %vm942 = vcmp.gt.f32.partialorder %v892, 0.0
        %vm943 = vcmp.gt.f32.partialorder %v895, 0.0
        %vm944 = vcmp.gt.f32.partialorder %v900, 0.0
        %vm945 = vcmp.gt.f32.partialorder %v903, 0.0
        %vm946 = vcmp.gt.f32.partialorder %v908, 0.0
        %vm947 = vcmp.gt.f32.partialorder %v911, 0.0
        %vm948 = vcmp.gt.f32.partialorder %v916, 0.0
        %vm949 = vcmp.gt.f32.partialorder %v919, 0.0
        %vm950 = vcmp.gt.f32.partialorder %v924, 0.0
        %vm951 = vcmp.gt.f32.partialorder %v927, 0.0
        %vm952 = vcmp.gt.f32.partialorder %v932, 0.0
        %vm953 = vcmp.gt.f32.partialorder %v935, 0.0
        %v954 = vmul.f32 %v876, 0.2
        %v955 = vmul.f32 %v879, 0.2
        %v956 = vmul.f32 %v884, 0.2
        %v957 = vmul.f32 %v887, 0.2
        %v958 = vmul.f32 %v892, 0.2
        %v959 = vmul.f32 %v895, 0.2
        %v960 = vmul.f32 %v900, 0.2
        %v961 = vmul.f32 %v903, 0.2
        %v962 = vmul.f32 %v908, 0.2
        %v963 = vmul.f32 %v911, 0.2
        %v964 = vmul.f32 %v916, 0.2
        %v965 = vmul.f32 %v919, 0.2
        %v966 = vmul.f32 %v924, 0.2
        %v967 = vmul.f32 %v927, 0.2
        %v968 = vmul.f32 %v932, 0.2
        %v969 = vmul.f32 %v935, 0.2
        %v970 = vsel %vm938, %v876, %v954
        %v971 = vsel %vm939, %v879, %v955
        %v972 = vsel %vm940, %v884, %v956
        %v973 = vsel %vm941, %v887, %v957
        %v974 = vsel %vm942, %v892, %v958
        %v975 = vsel %vm943, %v895, %v959
        %v976 = vsel %vm944, %v900, %v960
        %v977 = vsel %vm945, %v903, %v961
        %v978 = vsel %vm946, %v908, %v962
        %v979 = vsel %vm947, %v911, %v963
        %v980 = vsel %vm948, %v916, %v964
        %v981 = vsel %vm949, %v919, %v965
        %v982 = vsel %vm950, %v924, %v966
        %v983 = vsel %vm951, %v927, %v967
        %v984 = vsel %vm952, %v932, %v968
        %v985 = vsel %vm953, %v935, %v969
        %v986 = vpack.c.bf16 %v971, %v970
        %v987 = vpack.c.bf16 %v973, %v972
        %v988 = vpack.c.bf16 %v975, %v974
        %v989 = vpack.c.bf16 %v977, %v976
        %v990 = vpack.c.bf16 %v979, %v978
        %v991 = vpack.c.bf16 %v981, %v980
        %v992 = vpack.c.bf16 %v983, %v982
        %v993 = vpack.c.bf16 %v985, %v984
        %v994 = vld [vmem:[%s5] sm:$0xf]
        %v995 = vld [vmem:[%s5 + $0x4] sm:$0xf]
        %v996 = vld [vmem:[%s5 + $0x8] sm:$0xf]
        %v997 = vld [vmem:[%s5 + $0xc] sm:$0xf]
        %v998 = vld [vmem:[%s5 + $0x10] sm:$0xf]
        %v999 = vld [vmem:[%s5 + $0x14] sm:$0xf]
        %v1000 = vld [vmem:[%s5 + $0x18] sm:$0xf]
        %v1001 = vld [vmem:[%s5 + $0x1c] sm:$0xf]
        %v1002 = vld [vmem:[%s6] sm:$0x1]
        %v1004 = vlaneseq
        %v1005 = vshrl.u32 %v1004, 7
        %v1006 = vsub.s32 0, %v1005
        %v1007 = vrot.slane %v1002, %v1006
        %v1017 = vunpack.c.l.b16 %v994
        %v1018 = vunpack.c.l.b16 %v995
        %v1019 = vunpack.c.l.b16 %v996
        %v1020 = vunpack.c.l.b16 %v997
        %v1021 = vunpack.c.l.b16 %v998
        %v1022 = vunpack.c.l.b16 %v999
        %v1023 = vunpack.c.l.b16 %v1000
        %v1024 = vunpack.c.l.b16 %v1001
        %v1025 = vpack.c.b16 %v1018, %v1017
        %v1026 = vpack.c.b16 %v1020, %v1019
        %v1027 = vpack.c.b16 %v1022, %v1021
        %v1028 = vpack.c.b16 %v1024, %v1023
        %v1034 = vsel %vm816, %v986, 0
        %v1037 = vsel %vm816, %v987, 0
        %v1040 = vsel %vm816, %v988, 0
        %v1043 = vsel %vm816, %v989, 0
        %v1046 = vsel %vm816, %v990, 0
        %v1049 = vsel %vm816, %v991, 0
        %v1052 = vsel %vm816, %v992, 0
        %v1055 = vsel %vm816, %v993, 0
        %1057 = vmatprep.subr.bf16.mxu0 0
        %1058 = vmatpush1.bf16.msra.mxu0 %v1025
        %1059 = vmatprep.subr.bf16.mxu0 0
        %1060 = vmatpush1.bf16.msra.mxu0 %v1026
        %1061 = vmatprep.subr.bf16.mxu0 0
        %1062 = vmatpush1.bf16.msra.mxu0 %v1027
        %1063 = vmatprep.subr.bf16.mxu0 0
        %1064 = vmatpush1.bf16.msra.mxu0 %v1028
        %1065 = vmatprep.subr.bf16.mxu0 0
        %1066 = vmatpush1.bf16.msra.mxu0 0
        %1067 = vmatprep.subr.bf16.mxu0 0
        %1068 = vmatpush1.bf16.msra.mxu0 0
        %1069 = vmatprep.subr.bf16.mxu0 0
        %1070 = vmatpush1.bf16.msra.mxu0 0
        %1071 = vmatprep.subr.bf16.mxu0 0
        %1072 = vmatpush1.bf16.msra.mxu0 0
        %1073 = vmatprep.subr.bf16.mxu0 0
        %1074 = vmatpush1.bf16.msra.mxu0 0
        %1075 = vmatprep.subr.bf16.mxu0 0
        %1076 = vmatpush1.bf16.msra.mxu0 0
        %1077 = vmatprep.subr.bf16.mxu0 0
        %1078 = vmatpush1.bf16.msra.mxu0 0
        %1079 = vmatprep.subr.bf16.mxu0 0
        %1080 = vmatpush1.bf16.msra.mxu0 0
        %1081 = vmatprep.subr.bf16.mxu0 0
        %1082 = vmatpush1.bf16.msra.mxu0 0
        %1083 = vmatprep.subr.bf16.mxu0 0
        %1084 = vmatpush1.bf16.msra.mxu0 0
        %1085 = vmatprep.subr.bf16.mxu0 0
        %1086 = vmatpush1.bf16.msra.mxu0 0
        %1087 = vmatprep.subr.bf16.mxu0 0
        %1088 = vmatpush1.bf16.msra.mxu0 0
        %1089 = vmatprep.mubr.bf16.mxu0 0
        %1090 = vmatmul.mubr.bf16.gmra.mrb[0].mxu0 %v1034
        %v1091 = vpop.f32.mrb[0].mxu0
        %v1092 = vadd.f32 %v1007, %v1091
        %v1093 = vpop.f32.mrb[0].mxu0
        %v1094 = vpop.f32.mrb[0].mxu0
        %v1095 = vadd.f32 %v1007, %v1094
        %v1096 = vpop.f32.mrb[0].mxu0
        %1097 = vmatprep.mubr.bf16.mxu0 0
        %1098 = vmatmul.mubr.bf16.gmra.mrb[0].mxu0 %v1037
        %v1099 = vpop.f32.mrb[0].mxu0
        %v1100 = vadd.f32 %v1007, %v1099
        %v1101 = vpop.f32.mrb[0].mxu0
        %v1102 = vpop.f32.mrb[0].mxu0
        %v1103 = vadd.f32 %v1007, %v1102
        %v1104 = vpop.f32.mrb[0].mxu0
        %1105 = vmatprep.mubr.bf16.mxu0 0
        %1106 = vmatmul.mubr.bf16.gmra.mrb[0].mxu0 %v1040
        %v1107 = vpop.f32.mrb[0].mxu0
        %v1108 = vadd.f32 %v1007, %v1107
        %v1109 = vpop.f32.mrb[0].mxu0
        %v1110 = vpop.f32.mrb[0].mxu0
        %v1111 = vadd.f32 %v1007, %v1110
        %v1112 = vpop.f32.mrb[0].mxu0
        %1113 = vmatprep.mubr.bf16.mxu0 0
        %1114 = vmatmul.mubr.bf16.gmra.mrb[0].mxu0 %v1043
        %v1115 = vpop.f32.mrb[0].mxu0
        %v1116 = vadd.f32 %v1007, %v1115
        %v1117 = vpop.f32.mrb[0].mxu0
        %v1118 = vpop.f32.mrb[0].mxu0
        %v1119 = vadd.f32 %v1007, %v1118
        %v1120 = vpop.f32.mrb[0].mxu0
        %1121 = vmatprep.mubr.bf16.mxu0 0
        %1122 = vmatmul.mubr.bf16.gmra.mrb[0].mxu0 %v1046
        %v1123 = vpop.f32.mrb[0].mxu0
        %v1124 = vadd.f32 %v1007, %v1123
        %v1125 = vpop.f32.mrb[0].mxu0
        %v1126 = vpop.f32.mrb[0].mxu0
        %v1127 = vadd.f32 %v1007, %v1126
        %v1128 = vpop.f32.mrb[0].mxu0
        %1129 = vmatprep.mubr.bf16.mxu0 0
        %1130 = vmatmul.mubr.bf16.gmra.mrb[0].mxu0 %v1049
        %v1131 = vpop.f32.mrb[0].mxu0
        %v1132 = vadd.f32 %v1007, %v1131
        %v1133 = vpop.f32.mrb[0].mxu0
        %v1134 = vpop.f32.mrb[0].mxu0
        %v1135 = vadd.f32 %v1007, %v1134
        %v1136 = vpop.f32.mrb[0].mxu0
        %1137 = vmatprep.mubr.bf16.mxu0 0
        %1138 = vmatmul.mubr.bf16.gmra.mrb[0].mxu0 %v1052
        %v1139 = vpop.f32.mrb[0].mxu0
        %v1140 = vadd.f32 %v1007, %v1139
        %v1141 = vpop.f32.mrb[0].mxu0
        %v1142 = vpop.f32.mrb[0].mxu0
        %v1143 = vadd.f32 %v1007, %v1142
        %v1144 = vpop.f32.mrb[0].mxu0
        %1145 = vmatprep.mubr.bf16.mxu0 0
        %1146 = vmatmul.mubr.bf16.gmra.mrb[0].mxu0 %v1055
        %v1147 = vpop.f32.mrb[0].mxu0
        %v1148 = vadd.f32 %v1007, %v1147
        %v1149 = vpop.f32.mrb[0].mxu0
        %v1150 = vpop.f32.mrb[0].mxu0
        %v1151 = vadd.f32 %v1007, %v1150
        %v1152 = vpop.f32.mrb[0].mxu0
        %1153 = vdwg.mxu0
        %v1154 = vpack.c.bf16 %v1095, %v1092
        %v1155 = vpack.c.bf16 %v1103, %v1100
        %v1156 = vpack.c.bf16 %v1111, %v1108
        %v1157 = vpack.c.bf16 %v1119, %v1116
        %v1158 = vpack.c.bf16 %v1127, %v1124
        %v1159 = vpack.c.bf16 %v1135, %v1132
        %v1160 = vpack.c.bf16 %v1143, %v1140
        %v1161 = vpack.c.bf16 %v1151, %v1148
        %v1170 = vunpack.c.l.b16 %v1154
        %v1171 = vunpack.c.h.b16 %v1154
        %v1172 = vunpack.c.l.b16 %v1155
        %v1173 = vunpack.c.h.b16 %v1155
        %v1174 = vunpack.c.l.b16 %v1156
        %v1175 = vunpack.c.h.b16 %v1156
        %v1176 = vunpack.c.l.b16 %v1157
        %v1177 = vunpack.c.h.b16 %v1157
        %v1178 = vunpack.c.l.b16 %v1158
        %v1179 = vunpack.c.h.b16 %v1158
        %v1180 = vunpack.c.l.b16 %v1159
        %v1181 = vunpack.c.h.b16 %v1159
        %v1182 = vunpack.c.l.b16 %v1160
        %v1183 = vunpack.c.h.b16 %v1160
        %v1184 = vunpack.c.l.b16 %v1161
        %v1185 = vunpack.c.h.b16 %v1161
        %v1186 = vpack.c.b16 %v1170, %v1170
        %v1187 = vpack.c.b16 %v1171, %v1171
        %v1188 = vpack.c.b16 %v1172, %v1172
        %v1189 = vpack.c.b16 %v1173, %v1173
        %v1190 = vpack.c.b16 %v1174, %v1174
        %v1191 = vpack.c.b16 %v1175, %v1175
        %v1192 = vpack.c.b16 %v1176, %v1176
        %v1193 = vpack.c.b16 %v1177, %v1177
        %v1194 = vpack.c.b16 %v1178, %v1178
        %v1195 = vpack.c.b16 %v1179, %v1179
        %v1196 = vpack.c.b16 %v1180, %v1180
        %v1197 = vpack.c.b16 %v1181, %v1181
        %v1198 = vpack.c.b16 %v1182, %v1182
        %v1199 = vpack.c.b16 %v1183, %v1183
        %v1200 = vpack.c.b16 %v1184, %v1184
        %v1201 = vpack.c.b16 %v1185, %v1185
        %1218 = vst [vmem:[%s272] sm:$0xf] %v1186
        %1219 = vst [vmem:[%s272 + $0x4] sm:$0xf] %v1187
        %1220 = vst [vmem:[%s272 + $0x8] sm:$0xf] %v1188
        %1221 = vst [vmem:[%s272 + $0xc] sm:$0xf] %v1189
        %1222 = vst [vmem:[%s272 + $0x10] sm:$0xf] %v1190
        %1223 = vst [vmem:[%s272 + $0x14] sm:$0xf] %v1191
        %1224 = vst [vmem:[%s272 + $0x18] sm:$0xf] %v1192
        %1225 = vst [vmem:[%s272 + $0x1c] sm:$0xf] %v1193
        %1226 = vst [vmem:[%s272 + $0x20] sm:$0xf] %v1194
        %1227 = vst [vmem:[%s272 + $0x24] sm:$0xf] %v1195
        %1228 = vst [vmem:[%s272 + $0x28] sm:$0xf] %v1196
        %1229 = vst [vmem:[%s272 + $0x2c] sm:$0xf] %v1197
        %1230 = vst [vmem:[%s272 + $0x30] sm:$0xf] %v1198
        %1231 = vst [vmem:[%s272 + $0x34] sm:$0xf] %v1199
        %1232 = vst [vmem:[%s272 + $0x38] sm:$0xf] %v1200
        %1233 = vst [vmem:[%s272 + $0x3c] sm:$0xf] %v1201
        %s1234 = sand.u32 %s181, 1
        %s1235 = scalar_lea.sflag [#allocation3], %s1234
        %s1236 = sand.u32 %s181, 1
        %s1237 = smul.addr %s1236, 64
        %s1238 = scalar_lea.vmem [#allocation2], %s1237
        // Predicated region
        $region49: #{tpu_custom_call.1} parent=47 // pred_check
          %p1239 = pneg %p191
        $region50: #{tpu_custom_call.1} parent=47 // pred_check_branch
          %1241 = sbr.rel (%p1239) target = $region52
        $region51: #{tpu_custom_call.1} parent=47 // pred_region
          %s1242 = smul.u32 16, %s21
          %s1244 = ssub.s32 1024, 1024
          %1245 = vsyncadd %s1235, %s1244
          %s1246 = smul.addr %s1242, 64
          %s1247 = scalar_lea.hbm %s7, %s1246
          %s1248 = sshll.u32 %s1238, 4
          %s1249 = int_to_ptr.vmem [resolvable:$true] %s1248
          %1254 = dma.vmem_to_hbm [thread:$0]  %s1249, 1024, %s1247, %s1235, 64, 64, 4
        $region52: #{tpu_custom_call.1} parent=47 // pred_fallthru
          _
      $region48: #{tpu_custom_call.1} parent=5 // pred_fallthru
        _
      %p1255 = scmp.le.s32.totalorder 2, %s16
      // Predicated region
      $region53: #{tpu_custom_call.1} parent=5 // pred_check
        %p1256 = pneg %p1255
      $region54: #{tpu_custom_call.1} parent=5 // pred_check_branch
        %1258 = sbr.rel (%p1256) target = $region56
      $region55: #{tpu_custom_call.1} parent=5 // pred_region
        %s1259 = ssub.s32 %s16, 2
        // Predicated region
        $region57: #{tpu_custom_call.1} parent=55 // pred_check
          %p1260 = pneg %p197
        $region58: #{tpu_custom_call.1} parent=55 // pred_check_branch
          %1262 = sbr.rel (%p1260) target = $region60
        $region59: #{tpu_custom_call.1} parent=55 // pred_region
          %s1263 = sand.u32 %s182, 1
          %s1264 = scalar_lea.sflag [#allocation3], %s1263
          %s1265 = sand.u32 %s182, 1
          %s1266 = smul.addr %s1265, 64
          %s1267 = scalar_lea.vmem [#allocation2], %s1266
          %1268 = dma.done %s1264, 1024
        $region60: #{tpu_custom_call.1} parent=55 // pred_fallthru
          _
      $region56: #{tpu_custom_call.1} parent=5 // pred_fallthru
        _
    $region6: #{tpu_custom_call.1} parent=1 // loop_footer
      %s20 = sadd.s32 1, %s16
    $region7: #{tpu_custom_call.1} parent=1 // loop_footer_branch
      %15 = sbr.rel target = $region3
    $region8: #{tpu_custom_call.1} parent=1 // loop_exit
      _
    %1269 = vsyncpa [#allocation3], 1
    %s1270 = scalar_lea.sflag [#allocation3], 1
    %1271 = vsyncpa %s1270, 1

</llo_original>
